<compile_context>
chip_gen: v7x
topology: tpu7x:2x2x1
jax: 0.10.0
libtpu: 0.0.40
codegen_flags: <defaults>
</compile_context>

<pallas_src>
import functools

import jax
import jax.numpy as jnp
from jax.experimental import pallas as pl
from jax.experimental.pallas import tpu as pltpu


def _round_up(x: int, m: int) -> int:
    return (x + m - 1) // m * m


def _vmem_bytes(tile_n: int, dp: int, hp: int) -> int:
    """Rough VMEM footprint: double-buffered weights/activations + temps."""
    wts = 2 * (dp * hp * 2 + hp * dp * 2)      # bf16 W1 + W2, 2 buffers each
    biases = 2 * (hp + dp) * 4                 # f32 biases, 2 buffers each
    x_in = 2 * tile_n * dp * 2                 # bf16 input tile, double-buffered
    out = 2 * tile_n * dp * 4                  # f32 output tile, double-buffered
    inter = tile_n * hp * 4 + tile_n * dp * 4  # f32 h and y temporaries
    return wts + biases + x_in + out + inter


def _choose_tile_n(n: int, dp: int, hp: int, cap: int = 20 * 1024 * 1024) -> int:
    """Largest power-of-two-ish batch tile (<=512, >=8) that fits the budget."""
    tile = 512
    while tile > 8 and _vmem_bytes(tile, dp, hp) > cap:
        tile //= 2
    # Don't make the tile bigger than the (8-rounded) batch itself.
    tile = max(8, min(tile, _round_up(n, 8)))
    return tile


def _autoencoder_kernel(x_ref, w1_ref, b1_ref, w2_ref, b2_ref, o_ref):
    # x_ref:  [TILE_N, Dp] bf16   w1_ref: [Dp, Hp] bf16   b1_ref: [1, Hp] f32
    # w2_ref: [Hp, Dp] bf16       b2_ref: [1, Dp]  f32    o_ref:  [TILE_N, Dp] f32
    x = x_ref[...]

    # ---- encoder: Linear + ReLU (bf16 MXU matmul, f32 accumulate) ----
    h = jnp.dot(x, w1_ref[...], preferred_element_type=jnp.float32)
    h = jnp.maximum(h + b1_ref[...], 0.0)

    # ---- decoder: Linear + Sigmoid (bf16 MXU matmul, f32 accumulate) ----
    y = jnp.dot(h.astype(w2_ref.dtype), w2_ref[...],
                preferred_element_type=jnp.float32)
    y = y + b2_ref[...]
    o_ref[...] = jax.nn.sigmoid(y).astype(o_ref.dtype)


@jax.jit
def fast_autoencoder(x_nchw, w1, b1, w2, b2):
    """x_nchw: [N, C, H, W] float32. Returns [N, C, H, W] float32."""
    n, c, h, w = x_nchw.shape
    d = c * h * w
    hdim = w1.shape[1]

    # Padded sizes: lane-dense feature dim, MXU-dense hidden dim.
    dp = _round_up(d, 128)
    hp = _round_up(hdim, 128)
    tile_n = _choose_tile_n(n, dp, hp)
    n_pad = _round_up(max(n, tile_n), tile_n)

    # Flatten NCHW row-major (same as torch .view(N, -1)) and zero-pad.
    x2d = x_nchw.reshape(n, d)
    x2d = jnp.pad(x2d, ((0, n_pad - n), (0, dp - d))).astype(jnp.bfloat16)
    w1p = jnp.pad(w1, ((0, dp - d), (0, hp - hdim))).astype(jnp.bfloat16)
    b1p = jnp.pad(b1, (0, hp - hdim)).reshape(1, hp).astype(jnp.float32)
    w2p = jnp.pad(w2, ((0, hp - hdim), (0, dp - d))).astype(jnp.bfloat16)
    b2p = jnp.pad(b2, (0, dp - d)).reshape(1, dp).astype(jnp.float32)

    vmem_limit = int(min(32 * 1024 * 1024,
                         max(8 * 1024 * 1024, 2 * _vmem_bytes(tile_n, dp, hp))))

    cost = pl.CostEstimate(
        flops=4 * n_pad * dp * hp,                       # two matmuls
        transcendentals=n_pad * dp,                      # sigmoid exp
        bytes_accessed=(n_pad * dp * 2                   # x (bf16)
                        + 2 * dp * hp * 2                # W1 + W2 (bf16)
                        + (hp + dp) * 4                  # biases (f32)
                        + n_pad * dp * 4),               # output (f32)
    )

    out2d = pl.pallas_call(
        _autoencoder_kernel,
        out_shape=jax.ShapeDtypeStruct((n_pad, dp), jnp.float32),
        grid=(n_pad // tile_n,),
        in_specs=[
            pl.BlockSpec((tile_n, dp), lambda i: (i, 0)),   # x: streams over N
            pl.BlockSpec((dp, hp), lambda i: (0, 0)),       # W1: resident
            pl.BlockSpec((1, hp), lambda i: (0, 0)),        # b1: resident
            pl.BlockSpec((hp, dp), lambda i: (0, 0)),       # W2: resident
            pl.BlockSpec((1, dp), lambda i: (0, 0)),        # b2: resident
        ],
        out_specs=pl.BlockSpec((tile_n, dp), lambda i: (i, 0)),
        compiler_params=pltpu.CompilerParams(
            dimension_semantics=("parallel",),
            vmem_limit_bytes=vmem_limit,
        ),
        cost_estimate=cost,
    )(x2d, w1p, b1p, w2p, b2p)

    return out2d[:n, :d].reshape(n, c, h, w)


def init_params(key, d, hdim, dtype=jnp.float32):
    """Deterministic init mirroring torch.nn.Linear default (uniform +-1/sqrt(fan_in)).

    Weights are stored pre-transposed ([in, out]) so the kernel uses x @ W
    directly (equivalent to PyTorch's x @ W.T with W: [out, in])."""
    k1, k2, k3, k4 = jax.random.split(key, 4)
    bound1 = 1.0 / jnp.sqrt(d)
    bound2 = 1.0 / jnp.sqrt(hdim)
    w1 = jax.random.uniform(k1, (d, hdim), dtype, -bound1, bound1)
    b1 = jax.random.uniform(k2, (hdim,), dtype, -bound1, bound1)
    w2 = jax.random.uniform(k3, (hdim, d), dtype, -bound2, bound2)
    b2 = jax.random.uniform(k4, (d,), dtype, -bound2, bound2)
    return w1, b1, w2, b2


if __name__ == "__main__":
    key = jax.random.PRNGKey(0)
    kx, kp = jax.random.split(key)

    # small NCHW input consistent with a CNN autoencoder: batch=2, C=4, 16x16
    N, C, H, W = 2, 4, 16, 16
    D = C * H * W        # 1024
    HIDDEN = 32          # padded to 128 inside the wrapper

    x = jax.random.normal(kx, (N, C, H, W), jnp.float32)
    w1, b1, w2, b2 = init_params(kp, D, HIDDEN)

    out = fast_autoencoder(x, w1, b1, w2, b2)
    out = jax.block_until_ready(out)

    # sanity check against a plain-JAX bf16-weight reference (same precision
    # as the kernel: bf16 MXU operands, f32 accumulation / elementwise)
    x2d = x.reshape(N, D)
    h_ref = jnp.maximum(
        jnp.dot(x2d.astype(jnp.bfloat16), w1.astype(jnp.bfloat16),
                preferred_element_type=jnp.float32) + b1, 0.0)
    ref = jax.nn.sigmoid(
        jnp.dot(h_ref.astype(jnp.bfloat16), w2.astype(jnp.bfloat16),
                preferred_element_type=jnp.float32) + b2).reshape(N, C, H, W)

    assert out.shape == (N, C, H, W)
    assert jnp.allclose(out, ref, atol=1e-3, rtol=1e-3)

    print("KERNEL_OK")
</pallas_src>

<mosaic_0001>
module attributes {stable_mosaic.version = 11 : i64} {
  func.func @_autoencoder_kernel(%arg0: i32, %arg1: memref<8x1024xbf16, #tpu.memory_space<vmem>>, %arg2: memref<1024x128xbf16, #tpu.memory_space<vmem>>, %arg3: memref<1x128xf32, #tpu.memory_space<vmem>>, %arg4: memref<128x1024xbf16, #tpu.memory_space<vmem>>, %arg5: memref<1x1024xf32, #tpu.memory_space<vmem>>, %arg6: memref<8x1024xf32, #tpu.memory_space<vmem>>) attributes {dimension_semantics = [#tpu.dimension_semantics<parallel>], iteration_bounds = array<i64: 1>, scalar_prefetch = 0 : i64, scratch_operands = 0 : i64, tpu.core_type = #tpu.core_type<tc>, window_params = [{transform_indices = @transform_0, window_bounds = array<i64: 8, 1024>}, {pipeline_mode = #tpu.pipeline_mode<synchronous>, transform_indices = @transform_1, window_bounds = array<i64: 1024, 128>}, {pipeline_mode = #tpu.pipeline_mode<synchronous>, transform_indices = @transform_2, window_bounds = array<i64: 1, 128>}, {pipeline_mode = #tpu.pipeline_mode<synchronous>, transform_indices = @transform_3, window_bounds = array<i64: 128, 1024>}, {pipeline_mode = #tpu.pipeline_mode<synchronous>, transform_indices = @transform_4, window_bounds = array<i64: 1, 1024>}, {transform_indices = @transform_5, window_bounds = array<i64: 8, 1024>}]} {
    %c0 = arith.constant 0 : index
    %c0_0 = arith.constant 0 : index
    %0 = vector.load %arg1[%c0, %c0_0] : memref<8x1024xbf16, #tpu.memory_space<vmem>>, vector<8x1024xbf16>
    %c0_1 = arith.constant 0 : index
    %c0_2 = arith.constant 0 : index
    %1 = vector.load %arg2[%c0_1, %c0_2] : memref<1024x128xbf16, #tpu.memory_space<vmem>>, vector<1024x128xbf16>
    %cst = arith.constant dense<0.000000e+00> : vector<8x128xf32>
    %2 = tpu.matmul %0, %1, %cst {dimension_numbers = #tpu.dot_dimension_numbers<[1], [0], [0], [1], [0, 0, 1, 1], [], []>} : vector<8x1024xbf16>, vector<1024x128xbf16>, vector<8x128xf32> -> vector<8x128xf32>
    %c0_3 = arith.constant 0 : index
    %c0_4 = arith.constant 0 : index
    %3 = vector.load %arg3[%c0_3, %c0_4] : memref<1x128xf32, #tpu.memory_space<vmem>>, vector<1x128xf32>
    %4 = vector.broadcast %3 : vector<1x128xf32> to vector<8x128xf32>
    %5 = arith.addf %2, %4 : vector<8x128xf32>
    %cst_5 = arith.constant 0.000000e+00 : f32
    %6 = vector.broadcast %cst_5 : f32 to vector<8x128xf32>
    %7 = arith.maximumf %5, %6 : vector<8x128xf32>
    %8 = arith.truncf %7 : vector<8x128xf32> to vector<8x128xbf16>
    %c0_6 = arith.constant 0 : index
    %c0_7 = arith.constant 0 : index
    %9 = vector.load %arg4[%c0_6, %c0_7] : memref<128x1024xbf16, #tpu.memory_space<vmem>>, vector<128x1024xbf16>
    %cst_8 = arith.constant dense<0.000000e+00> : vector<8x1024xf32>
    %10 = tpu.matmul %8, %9, %cst_8 {dimension_numbers = #tpu.dot_dimension_numbers<[1], [0], [0], [1], [0, 0, 1, 1], [], []>} : vector<8x128xbf16>, vector<128x1024xbf16>, vector<8x1024xf32> -> vector<8x1024xf32>
    %c0_9 = arith.constant 0 : index
    %c0_10 = arith.constant 0 : index
    %11 = vector.load %arg5[%c0_9, %c0_10] : memref<1x1024xf32, #tpu.memory_space<vmem>>, vector<1x1024xf32>
    %12 = vector.broadcast %11 : vector<1x1024xf32> to vector<8x1024xf32>
    %13 = arith.addf %10, %12 : vector<8x1024xf32>
    %14 = arith.negf %13 : vector<8x1024xf32>
    %15 = math.exp %14 : vector<8x1024xf32>
    %cst_11 = arith.constant 1.000000e+00 : f32
    %16 = vector.broadcast %cst_11 : f32 to vector<8x1024xf32>
    %17 = arith.addf %16, %15 : vector<8x1024xf32>
    %18 = arith.divf %16, %17 : vector<8x1024xf32>
    %c0_12 = arith.constant 0 : index
    %c0_13 = arith.constant 0 : index
    %19 = vector.load %arg6[%c0_12, %c0_13] : memref<8x1024xf32, #tpu.memory_space<vmem>>, vector<8x1024xf32>
    tpu.vector_store %arg6[%c0_12, %c0_13], %18 {strides = array<i32>} : memref<8x1024xf32, #tpu.memory_space<vmem>>, vector<8x1024xf32>,
    return
  }
  func.func @transform_0(%arg0: i32) -> (i32, i32) {
    %c0_i32 = arith.constant 0 : i32
    %c0_i32_0 = arith.constant 0 : i32
    return %arg0, %c0_i32 : i32, i32
  }
  func.func @transform_1(%arg0: i32) -> (i32, i32) {
    %c0_i32 = arith.constant 0 : i32
    %c0_i32_0 = arith.constant 0 : i32
    %c0_i32_1 = arith.constant 0 : i32
    return %c0_i32, %c0_i32_0 : i32, i32
  }
  func.func @transform_2(%arg0: i32) -> (i32, i32) {
    %c0_i32 = arith.constant 0 : i32
    %c0_i32_0 = arith.constant 0 : i32
    %c0_i32_1 = arith.constant 0 : i32
    return %c0_i32, %c0_i32_0 : i32, i32
  }
  func.func @transform_3(%arg0: i32) -> (i32, i32) {
    %c0_i32 = arith.constant 0 : i32
    %c0_i32_0 = arith.constant 0 : i32
    %c0_i32_1 = arith.constant 0 : i32
    return %c0_i32, %c0_i32_0 : i32, i32
  }
  func.func @transform_4(%arg0: i32) -> (i32, i32) {
    %c0_i32 = arith.constant 0 : i32
    %c0_i32_0 = arith.constant 0 : i32
    %c0_i32_1 = arith.constant 0 : i32
    return %c0_i32, %c0_i32_0 : i32, i32
  }
  func.func @transform_5(%arg0: i32) -> (i32, i32) {
    %c0_i32 = arith.constant 0 : i32
    %c0_i32_0 = arith.constant 0 : i32
    return %arg0, %c0_i32 : i32, i32
  }
}

</mosaic_0001>

<llo_original>
// kernel: fast_autoencoder.1
$region0: #{fast_autoencoder.1}
  #allocation0 [shape = 'u32[]', space=smem, size = 0x4, offset = 0x4, fixed_abs, tag = 'smem constant byte address 0x4 - core index']
  #allocation1 [shape = 'u32[144,128]{1,0:T(1,128)}', space=vmem, size = 0x12000, scoped, tag = 'internal scratch']
  %s0 = inlined_call_operand.vmem [shape: bf16[8,1024], index: 0, kind: input, shape index: {}]
  %s1 = inlined_call_operand.vmem [shape: bf16[1024,128], index: 1, kind: input, shape index: {}]
  %s2 = inlined_call_operand.vmem [shape: f32[1,128], index: 2, kind: input, shape index: {}]
  %s3 = inlined_call_operand.vmem [shape: bf16[128,1024], index: 3, kind: input, shape index: {}]
  %s4 = inlined_call_operand.vmem [shape: f32[1,1024], index: 4, kind: input, shape index: {}]
  %s5 = inlined_call_operand.vmem [shape: f32[8,1024], index: 5, kind: output, shape index: {}]
  %s6 = sld [smem:[#allocation0]]
  $region30: #{fast_autoencoder.1} parent=0
    _
  %s8 = ssub.s32 1, %s6
  %s9 = scalar_select 0, %s8, %s6
  // Predicated region
  $region2: #{fast_autoencoder.1} parent=0 // pred_check
    _
  $region3: #{fast_autoencoder.1} parent=0 // pred_check_branch
    %11 = sbr.rel (0) target = $region5
  $region4: #{fast_autoencoder.1} parent=0 // pred_region
    _
  $region5: #{fast_autoencoder.1} parent=0 // pred_fallthru
    _
  // Predicated region
  $region6: #{fast_autoencoder.1} parent=0 // pred_check
    _
  $region7: #{fast_autoencoder.1} parent=0 // pred_check_branch
    %13 = sbr.rel (0) target = $region9
  $region8: #{fast_autoencoder.1} parent=0 // pred_region
    _
  $region9: #{fast_autoencoder.1} parent=0 // pred_fallthru
    _
  // Predicated region
  $region10: #{fast_autoencoder.1} parent=0 // pred_check
    _
  $region11: #{fast_autoencoder.1} parent=0 // pred_check_branch
    %15 = sbr.rel (0) target = $region13
  $region12: #{fast_autoencoder.1} parent=0 // pred_region
    _
  $region13: #{fast_autoencoder.1} parent=0 // pred_fallthru
    _
  // Predicated region
  $region14: #{fast_autoencoder.1} parent=0 // pred_check
    _
  $region15: #{fast_autoencoder.1} parent=0 // pred_check_branch
    %17 = sbr.rel (0) target = $region17
  $region16: #{fast_autoencoder.1} parent=0 // pred_region
    _
  $region17: #{fast_autoencoder.1} parent=0 // pred_fallthru
    _
  // Predicated region
  $region18: #{fast_autoencoder.1} parent=0 // pred_check
    _
  $region19: #{fast_autoencoder.1} parent=0 // pred_check_branch
    %19 = sbr.rel (0) target = $region21
  $region20: #{fast_autoencoder.1} parent=0 // pred_region
    _
  $region21: #{fast_autoencoder.1} parent=0 // pred_fallthru
    _
  %v21 = vld [vmem:[%s0] sm:$0xff]
  %v22 = vld [vmem:[%s0 + $0x8] sm:$0xff]
  %v23 = vld [vmem:[%s0 + $0x10] sm:$0xff]
  %v24 = vld [vmem:[%s0 + $0x18] sm:$0xff]
  %v25 = vld [vmem:[%s1] sm:$0xf]
  %v26 = vld [vmem:[%s1 + $0x4] sm:$0xf]
  %v27 = vld [vmem:[%s1 + $0x8] sm:$0xf]
  %v28 = vld [vmem:[%s1 + $0xc] sm:$0xf]
  %v29 = vld [vmem:[%s1 + $0x10] sm:$0xf]
  %v30 = vld [vmem:[%s1 + $0x14] sm:$0xf]
  %v31 = vld [vmem:[%s1 + $0x18] sm:$0xf]
  %v32 = vld [vmem:[%s1 + $0x1c] sm:$0xf]
  %v33 = vld [vmem:[%s1 + $0x20] sm:$0xf]
  %v34 = vld [vmem:[%s1 + $0x24] sm:$0xf]
  %v35 = vld [vmem:[%s1 + $0x28] sm:$0xf]
  %v36 = vld [vmem:[%s1 + $0x2c] sm:$0xf]
  %v37 = vld [vmem:[%s1 + $0x30] sm:$0xf]
  %v38 = vld [vmem:[%s1 + $0x34] sm:$0xf]
  %v39 = vld [vmem:[%s1 + $0x38] sm:$0xf]
  %v40 = vld [vmem:[%s1 + $0x3c] sm:$0xf]
  %v41 = vld [vmem:[%s1 + $0x40] sm:$0xf]
  %v42 = vld [vmem:[%s1 + $0x44] sm:$0xf]
  %v43 = vld [vmem:[%s1 + $0x48] sm:$0xf]
  %v44 = vld [vmem:[%s1 + $0x4c] sm:$0xf]
  %v45 = vld [vmem:[%s1 + $0x50] sm:$0xf]
  %v46 = vld [vmem:[%s1 + $0x54] sm:$0xf]
  %v47 = vld [vmem:[%s1 + $0x58] sm:$0xf]
  %v48 = vld [vmem:[%s1 + $0x5c] sm:$0xf]
  %v49 = vld [vmem:[%s1 + $0x60] sm:$0xf]
  %v50 = vld [vmem:[%s1 + $0x64] sm:$0xf]
  %v51 = vld [vmem:[%s1 + $0x68] sm:$0xf]
  %v52 = vld [vmem:[%s1 + $0x6c] sm:$0xf]
  %v53 = vld [vmem:[%s1 + $0x70] sm:$0xf]
  %v54 = vld [vmem:[%s1 + $0x74] sm:$0xf]
  %v55 = vld [vmem:[%s1 + $0x78] sm:$0xf]
  %v56 = vld [vmem:[%s1 + $0x7c] sm:$0xf]
  %v57 = vld [vmem:[%s1 + $0x80] sm:$0xf]
  %v58 = vld [vmem:[%s1 + $0x84] sm:$0xf]
  %v59 = vld [vmem:[%s1 + $0x88] sm:$0xf]
  %v60 = vld [vmem:[%s1 + $0x8c] sm:$0xf]
  %v61 = vld [vmem:[%s1 + $0x90] sm:$0xf]
  %v62 = vld [vmem:[%s1 + $0x94] sm:$0xf]
  %v63 = vld [vmem:[%s1 + $0x98] sm:$0xf]
  %v64 = vld [vmem:[%s1 + $0x9c] sm:$0xf]
  %v65 = vld [vmem:[%s1 + $0xa0] sm:$0xf]
  %v66 = vld [vmem:[%s1 + $0xa4] sm:$0xf]
  %v67 = vld [vmem:[%s1 + $0xa8] sm:$0xf]
  %v68 = vld [vmem:[%s1 + $0xac] sm:$0xf]
  %v69 = vld [vmem:[%s1 + $0xb0] sm:$0xf]
  %v70 = vld [vmem:[%s1 + $0xb4] sm:$0xf]
  %v71 = vld [vmem:[%s1 + $0xb8] sm:$0xf]
  %v72 = vld [vmem:[%s1 + $0xbc] sm:$0xf]
  %v73 = vld [vmem:[%s1 + $0xc0] sm:$0xf]
  %v74 = vld [vmem:[%s1 + $0xc4] sm:$0xf]
  %v75 = vld [vmem:[%s1 + $0xc8] sm:$0xf]
  %v76 = vld [vmem:[%s1 + $0xcc] sm:$0xf]
  %v77 = vld [vmem:[%s1 + $0xd0] sm:$0xf]
  %v78 = vld [vmem:[%s1 + $0xd4] sm:$0xf]
  %v79 = vld [vmem:[%s1 + $0xd8] sm:$0xf]
  %v80 = vld [vmem:[%s1 + $0xdc] sm:$0xf]
  %v81 = vld [vmem:[%s1 + $0xe0] sm:$0xf]
  %v82 = vld [vmem:[%s1 + $0xe4] sm:$0xf]
  %v83 = vld [vmem:[%s1 + $0xe8] sm:$0xf]
  %v84 = vld [vmem:[%s1 + $0xec] sm:$0xf]
  %v85 = vld [vmem:[%s1 + $0xf0] sm:$0xf]
  %v86 = vld [vmem:[%s1 + $0xf4] sm:$0xf]
  %v87 = vld [vmem:[%s1 + $0xf8] sm:$0xf]
  %v88 = vld [vmem:[%s1 + $0xfc] sm:$0xf]
  %v89 = vld [vmem:[%s1 + $0x100] sm:$0xf]
  %v90 = vld [vmem:[%s1 + $0x104] sm:$0xf]
  %v91 = vld [vmem:[%s1 + $0x108] sm:$0xf]
  %v92 = vld [vmem:[%s1 + $0x10c] sm:$0xf]
  %v93 = vld [vmem:[%s1 + $0x110] sm:$0xf]
  %v94 = vld [vmem:[%s1 + $0x114] sm:$0xf]
  %v95 = vld [vmem:[%s1 + $0x118] sm:$0xf]
  %v96 = vld [vmem:[%s1 + $0x11c] sm:$0xf]
  %v97 = vld [vmem:[%s1 + $0x120] sm:$0xf]
  %v98 = vld [vmem:[%s1 + $0x124] sm:$0xf]
  %v99 = vld [vmem:[%s1 + $0x128] sm:$0xf]
  %v100 = vld [vmem:[%s1 + $0x12c] sm:$0xf]
  %v101 = vld [vmem:[%s1 + $0x130] sm:$0xf]
  %v102 = vld [vmem:[%s1 + $0x134] sm:$0xf]
  %v103 = vld [vmem:[%s1 + $0x138] sm:$0xf]
  %v104 = vld [vmem:[%s1 + $0x13c] sm:$0xf]
  %v105 = vld [vmem:[%s1 + $0x140] sm:$0xf]
  %v106 = vld [vmem:[%s1 + $0x144] sm:$0xf]
  %v107 = vld [vmem:[%s1 + $0x148] sm:$0xf]
  %v108 = vld [vmem:[%s1 + $0x14c] sm:$0xf]
  %v109 = vld [vmem:[%s1 + $0x150] sm:$0xf]
  %v110 = vld [vmem:[%s1 + $0x154] sm:$0xf]
  %v111 = vld [vmem:[%s1 + $0x158] sm:$0xf]
  %v112 = vld [vmem:[%s1 + $0x15c] sm:$0xf]
  %v113 = vld [vmem:[%s1 + $0x160] sm:$0xf]
  %v114 = vld [vmem:[%s1 + $0x164] sm:$0xf]
  %v115 = vld [vmem:[%s1 + $0x168] sm:$0xf]
  %v116 = vld [vmem:[%s1 + $0x16c] sm:$0xf]
  %v117 = vld [vmem:[%s1 + $0x170] sm:$0xf]
  %v118 = vld [vmem:[%s1 + $0x174] sm:$0xf]
  %v119 = vld [vmem:[%s1 + $0x178] sm:$0xf]
  %v120 = vld [vmem:[%s1 + $0x17c] sm:$0xf]
  %v121 = vld [vmem:[%s1 + $0x180] sm:$0xf]
  %v122 = vld [vmem:[%s1 + $0x184] sm:$0xf]
  %v123 = vld [vmem:[%s1 + $0x188] sm:$0xf]
  %v124 = vld [vmem:[%s1 + $0x18c] sm:$0xf]
  %v125 = vld [vmem:[%s1 + $0x190] sm:$0xf]
  %v126 = vld [vmem:[%s1 + $0x194] sm:$0xf]
  %v127 = vld [vmem:[%s1 + $0x198] sm:$0xf]
  %v128 = vld [vmem:[%s1 + $0x19c] sm:$0xf]
  %v129 = vld [vmem:[%s1 + $0x1a0] sm:$0xf]
  %v130 = vld [vmem:[%s1 + $0x1a4] sm:$0xf]
  %v131 = vld [vmem:[%s1 + $0x1a8] sm:$0xf]
  %v132 = vld [vmem:[%s1 + $0x1ac] sm:$0xf]
  %v133 = vld [vmem:[%s1 + $0x1b0] sm:$0xf]
  %v134 = vld [vmem:[%s1 + $0x1b4] sm:$0xf]
  %v135 = vld [vmem:[%s1 + $0x1b8] sm:$0xf]
  %v136 = vld [vmem:[%s1 + $0x1bc] sm:$0xf]
  %v137 = vld [vmem:[%s1 + $0x1c0] sm:$0xf]
  %v138 = vld [vmem:[%s1 + $0x1c4] sm:$0xf]
  %v139 = vld [vmem:[%s1 + $0x1c8] sm:$0xf]
  %v140 = vld [vmem:[%s1 + $0x1cc] sm:$0xf]
  %v141 = vld [vmem:[%s1 + $0x1d0] sm:$0xf]
  %v142 = vld [vmem:[%s1 + $0x1d4] sm:$0xf]
  %v143 = vld [vmem:[%s1 + $0x1d8] sm:$0xf]
  %v144 = vld [vmem:[%s1 + $0x1dc] sm:$0xf]
  %v145 = vld [vmem:[%s1 + $0x1e0] sm:$0xf]
  %v146 = vld [vmem:[%s1 + $0x1e4] sm:$0xf]
  %v147 = vld [vmem:[%s1 + $0x1e8] sm:$0xf]
  %v148 = vld [vmem:[%s1 + $0x1ec] sm:$0xf]
  %v149 = vld [vmem:[%s1 + $0x1f0] sm:$0xf]
  %v150 = vld [vmem:[%s1 + $0x1f4] sm:$0xf]
  %v151 = vld [vmem:[%s1 + $0x1f8] sm:$0xf]
  %v152 = vld [vmem:[%s1 + $0x1fc] sm:$0xf]
  %v153 = vld [vmem:[%s2] sm:$0x1]
  %v155 = vlaneseq
  %v156 = vshrl.u32 %v155, 7
  %v157 = vsub.s32 0, %v156
  %v158 = vrot.slane %v153, %v157
  %v164 = vunpack.c.l.b16 %v21
  %v165 = vunpack.c.h.b16 %v21
  %v166 = vunpack.c.l.b16 %v22
  %v167 = vunpack.c.h.b16 %v22
  %v168 = vunpack.c.l.b16 %v23
  %v169 = vunpack.c.h.b16 %v23
  %v170 = vunpack.c.l.b16 %v24
  %v171 = vunpack.c.h.b16 %v24
  %v172 = vpack.c.b16 %v164, %v164
  %v173 = vpack.c.b16 %v165, %v165
  %v174 = vpack.c.b16 %v166, %v166
  %v175 = vpack.c.b16 %v167, %v167
  %v176 = vpack.c.b16 %v168, %v168
  %v177 = vpack.c.b16 %v169, %v169
  %v178 = vpack.c.b16 %v170, %v170
  %v179 = vpack.c.b16 %v171, %v171
  %v316 = vunpack.c.l.b16 %v25
  %v317 = vunpack.c.l.b16 %v26
  %v318 = vunpack.c.l.b16 %v27
  %v319 = vunpack.c.l.b16 %v28
  %v320 = vunpack.c.l.b16 %v29
  %v321 = vunpack.c.l.b16 %v30
  %v322 = vunpack.c.l.b16 %v31
  %v323 = vunpack.c.l.b16 %v32
  %v324 = vunpack.c.l.b16 %v33
  %v325 = vunpack.c.l.b16 %v34
  %v326 = vunpack.c.l.b16 %v35
  %v327 = vunpack.c.l.b16 %v36
  %v328 = vunpack.c.l.b16 %v37
  %v329 = vunpack.c.l.b16 %v38
  %v330 = vunpack.c.l.b16 %v39
  %v331 = vunpack.c.l.b16 %v40
  %v332 = vunpack.c.l.b16 %v41
  %v333 = vunpack.c.l.b16 %v42
  %v334 = vunpack.c.l.b16 %v43
  %v335 = vunpack.c.l.b16 %v44
  %v336 = vunpack.c.l.b16 %v45
  %v337 = vunpack.c.l.b16 %v46
  %v338 = vunpack.c.l.b16 %v47
  %v339 = vunpack.c.l.b16 %v48
  %v340 = vunpack.c.l.b16 %v49
  %v341 = vunpack.c.l.b16 %v50
  %v342 = vunpack.c.l.b16 %v51
  %v343 = vunpack.c.l.b16 %v52
  %v344 = vunpack.c.l.b16 %v53
  %v345 = vunpack.c.l.b16 %v54
  %v346 = vunpack.c.l.b16 %v55
  %v347 = vunpack.c.l.b16 %v56
  %v348 = vunpack.c.l.b16 %v57
  %v349 = vunpack.c.l.b16 %v58
  %v350 = vunpack.c.l.b16 %v59
  %v351 = vunpack.c.l.b16 %v60
  %v352 = vunpack.c.l.b16 %v61
  %v353 = vunpack.c.l.b16 %v62
  %v354 = vunpack.c.l.b16 %v63
  %v355 = vunpack.c.l.b16 %v64
  %v356 = vunpack.c.l.b16 %v65
  %v357 = vunpack.c.l.b16 %v66
  %v358 = vunpack.c.l.b16 %v67
  %v359 = vunpack.c.l.b16 %v68
  %v360 = vunpack.c.l.b16 %v69
  %v361 = vunpack.c.l.b16 %v70
  %v362 = vunpack.c.l.b16 %v71
  %v363 = vunpack.c.l.b16 %v72
  %v364 = vunpack.c.l.b16 %v73
  %v365 = vunpack.c.l.b16 %v74
  %v366 = vunpack.c.l.b16 %v75
  %v367 = vunpack.c.l.b16 %v76
  %v368 = vunpack.c.l.b16 %v77
  %v369 = vunpack.c.l.b16 %v78
  %v370 = vunpack.c.l.b16 %v79
  %v371 = vunpack.c.l.b16 %v80
  %v372 = vunpack.c.l.b16 %v81
  %v373 = vunpack.c.l.b16 %v82
  %v374 = vunpack.c.l.b16 %v83
  %v375 = vunpack.c.l.b16 %v84
  %v376 = vunpack.c.l.b16 %v85
  %v377 = vunpack.c.l.b16 %v86
  %v378 = vunpack.c.l.b16 %v87
  %v379 = vunpack.c.l.b16 %v88
  %v380 = vunpack.c.l.b16 %v89
  %v381 = vunpack.c.l.b16 %v90
  %v382 = vunpack.c.l.b16 %v91
  %v383 = vunpack.c.l.b16 %v92
  %v384 = vunpack.c.l.b16 %v93
  %v385 = vunpack.c.l.b16 %v94
  %v386 = vunpack.c.l.b16 %v95
  %v387 = vunpack.c.l.b16 %v96
  %v388 = vunpack.c.l.b16 %v97
  %v389 = vunpack.c.l.b16 %v98
  %v390 = vunpack.c.l.b16 %v99
  %v391 = vunpack.c.l.b16 %v100
  %v392 = vunpack.c.l.b16 %v101
  %v393 = vunpack.c.l.b16 %v102
  %v394 = vunpack.c.l.b16 %v103
  %v395 = vunpack.c.l.b16 %v104
  %v396 = vunpack.c.l.b16 %v105
  %v397 = vunpack.c.l.b16 %v106
  %v398 = vunpack.c.l.b16 %v107
  %v399 = vunpack.c.l.b16 %v108
  %v400 = vunpack.c.l.b16 %v109
  %v401 = vunpack.c.l.b16 %v110
  %v402 = vunpack.c.l.b16 %v111
  %v403 = vunpack.c.l.b16 %v112
  %v404 = vunpack.c.l.b16 %v113
  %v405 = vunpack.c.l.b16 %v114
  %v406 = vunpack.c.l.b16 %v115
  %v407 = vunpack.c.l.b16 %v116
  %v408 = vunpack.c.l.b16 %v117
  %v409 = vunpack.c.l.b16 %v118
  %v410 = vunpack.c.l.b16 %v119
  %v411 = vunpack.c.l.b16 %v120
  %v412 = vunpack.c.l.b16 %v121
  %v413 = vunpack.c.l.b16 %v122
  %v414 = vunpack.c.l.b16 %v123
  %v415 = vunpack.c.l.b16 %v124
  %v416 = vunpack.c.l.b16 %v125
  %v417 = vunpack.c.l.b16 %v126
  %v418 = vunpack.c.l.b16 %v127
  %v419 = vunpack.c.l.b16 %v128
  %v420 = vunpack.c.l.b16 %v129
  %v421 = vunpack.c.l.b16 %v130
  %v422 = vunpack.c.l.b16 %v131
  %v423 = vunpack.c.l.b16 %v132
  %v424 = vunpack.c.l.b16 %v133
  %v425 = vunpack.c.l.b16 %v134
  %v426 = vunpack.c.l.b16 %v135
  %v427 = vunpack.c.l.b16 %v136
  %v428 = vunpack.c.l.b16 %v137
  %v429 = vunpack.c.l.b16 %v138
  %v430 = vunpack.c.l.b16 %v139
  %v431 = vunpack.c.l.b16 %v140
  %v432 = vunpack.c.l.b16 %v141
  %v433 = vunpack.c.l.b16 %v142
  %v434 = vunpack.c.l.b16 %v143
  %v435 = vunpack.c.l.b16 %v144
  %v436 = vunpack.c.l.b16 %v145
  %v437 = vunpack.c.l.b16 %v146
  %v438 = vunpack.c.l.b16 %v147
  %v439 = vunpack.c.l.b16 %v148
  %v440 = vunpack.c.l.b16 %v149
  %v441 = vunpack.c.l.b16 %v150
  %v442 = vunpack.c.l.b16 %v151
  %v443 = vunpack.c.l.b16 %v152
  %v444 = vpack.c.b16 %v317, %v316
  %v445 = vpack.c.b16 %v319, %v318
  %v446 = vpack.c.b16 %v321, %v320
  %v447 = vpack.c.b16 %v323, %v322
  %v448 = vpack.c.b16 %v325, %v324
  %v449 = vpack.c.b16 %v327, %v326
  %v450 = vpack.c.b16 %v329, %v328
  %v451 = vpack.c.b16 %v331, %v330
  %v452 = vpack.c.b16 %v333, %v332
  %v453 = vpack.c.b16 %v335, %v334
  %v454 = vpack.c.b16 %v337, %v336
  %v455 = vpack.c.b16 %v339, %v338
  %v456 = vpack.c.b16 %v341, %v340
  %v457 = vpack.c.b16 %v343, %v342
  %v458 = vpack.c.b16 %v345, %v344
  %v459 = vpack.c.b16 %v347, %v346
  %v460 = vpack.c.b16 %v349, %v348
  %v461 = vpack.c.b16 %v351, %v350
  %v462 = vpack.c.b16 %v353, %v352
  %v463 = vpack.c.b16 %v355, %v354
  %v464 = vpack.c.b16 %v357, %v356
  %v465 = vpack.c.b16 %v359, %v358
  %v466 = vpack.c.b16 %v361, %v360
  %v467 = vpack.c.b16 %v363, %v362
  %v468 = vpack.c.b16 %v365, %v364
  %v469 = vpack.c.b16 %v367, %v366
  %v470 = vpack.c.b16 %v369, %v368
  %v471 = vpack.c.b16 %v371, %v370
  %v472 = vpack.c.b16 %v373, %v372
  %v473 = vpack.c.b16 %v375, %v374
  %v474 = vpack.c.b16 %v377, %v376
  %v475 = vpack.c.b16 %v379, %v378
  %v476 = vpack.c.b16 %v381, %v380
  %v477 = vpack.c.b16 %v383, %v382
  %v478 = vpack.c.b16 %v385, %v384
  %v479 = vpack.c.b16 %v387, %v386
  %v480 = vpack.c.b16 %v389, %v388
  %v481 = vpack.c.b16 %v391, %v390
  %v482 = vpack.c.b16 %v393, %v392
  %v483 = vpack.c.b16 %v395, %v394
  %v484 = vpack.c.b16 %v397, %v396
  %v485 = vpack.c.b16 %v399, %v398
  %v486 = vpack.c.b16 %v401, %v400
  %v487 = vpack.c.b16 %v403, %v402
  %v488 = vpack.c.b16 %v405, %v404
  %v489 = vpack.c.b16 %v407, %v406
  %v490 = vpack.c.b16 %v409, %v408
  %v491 = vpack.c.b16 %v411, %v410
  %v492 = vpack.c.b16 %v413, %v412
  %v493 = vpack.c.b16 %v415, %v414
  %v494 = vpack.c.b16 %v417, %v416
  %v495 = vpack.c.b16 %v419, %v418
  %v496 = vpack.c.b16 %v421, %v420
  %v497 = vpack.c.b16 %v423, %v422
  %v498 = vpack.c.b16 %v425, %v424
  %v499 = vpack.c.b16 %v427, %v426
  %v500 = vpack.c.b16 %v429, %v428
  %v501 = vpack.c.b16 %v431, %v430
  %v502 = vpack.c.b16 %v433, %v432
  %v503 = vpack.c.b16 %v435, %v434
  %v504 = vpack.c.b16 %v437, %v436
  %v505 = vpack.c.b16 %v439, %v438
  %v506 = vpack.c.b16 %v441, %v440
  %v507 = vpack.c.b16 %v443, %v442
  %572 = vmatprep.subr.bf16.mxu0 0
  %573 = vmatpush1.bf16.msra.mxu0 %v444
  %574 = vmatprep.subr.bf16.mxu0 0
  %575 = vmatpush1.bf16.msra.mxu0 %v445
  %576 = vmatprep.subr.bf16.mxu0 0
  %577 = vmatpush1.bf16.msra.mxu0 %v446
  %578 = vmatprep.subr.bf16.mxu0 0
  %579 = vmatpush1.bf16.msra.mxu0 %v447
  %580 = vmatprep.subr.bf16.mxu0 0
  %581 = vmatpush1.bf16.msra.mxu0 %v448
  %582 = vmatprep.subr.bf16.mxu0 0
  %583 = vmatpush1.bf16.msra.mxu0 %v449
  %584 = vmatprep.subr.bf16.mxu0 0
  %585 = vmatpush1.bf16.msra.mxu0 %v450
  %586 = vmatprep.subr.bf16.mxu0 0
  %587 = vmatpush1.bf16.msra.mxu0 %v451
  %588 = vmatprep.subr.bf16.mxu0 0
  %589 = vmatpush1.bf16.msra.mxu0 %v452
  %590 = vmatprep.subr.bf16.mxu0 0
  %591 = vmatpush1.bf16.msra.mxu0 %v453
  %592 = vmatprep.subr.bf16.mxu0 0
  %593 = vmatpush1.bf16.msra.mxu0 %v454
  %594 = vmatprep.subr.bf16.mxu0 0
  %595 = vmatpush1.bf16.msra.mxu0 %v455
  %596 = vmatprep.subr.bf16.mxu0 0
  %597 = vmatpush1.bf16.msra.mxu0 %v456
  %598 = vmatprep.subr.bf16.mxu0 0
  %599 = vmatpush1.bf16.msra.mxu0 %v457
  %600 = vmatprep.subr.bf16.mxu0 0
  %601 = vmatpush1.bf16.msra.mxu0 %v458
  %602 = vmatprep.subr.bf16.mxu0 0
  %603 = vmatpush1.bf16.msra.mxu0 %v459
  %604 = vmatprep.mubr.bf16.mxu0 %v173
  %605 = vmatmul.mubr.bf16.gmra.mrb[0].mxu0 %v172
  %v606 = vpop.f32.mrb[0].mxu0
  %v607 = vadd.f32 %v158, %v606
  %v608 = vpop.f32.mrb[0].mxu0
  %v609 = vpop.f32.mrb[0].mxu0
  %v610 = vpop.f32.mrb[0].mxu0
  %611 = vdwg.mxu0
  %612 = vmatprep.subr.bf16.mxu0 0
  %613 = vmatpush1.bf16.msra.mxu0 %v460
  %614 = vmatprep.subr.bf16.mxu0 0
  %615 = vmatpush1.bf16.msra.mxu0 %v461
  %616 = vmatprep.subr.bf16.mxu0 0
  %617 = vmatpush1.bf16.msra.mxu0 %v462
  %618 = vmatprep.subr.bf16.mxu0 0
  %619 = vmatpush1.bf16.msra.mxu0 %v463
  %620 = vmatprep.subr.bf16.mxu0 0
  %621 = vmatpush1.bf16.msra.mxu0 %v464
  %622 = vmatprep.subr.bf16.mxu0 0
  %623 = vmatpush1.bf16.msra.mxu0 %v465
  %624 = vmatprep.subr.bf16.mxu0 0
  %625 = vmatpush1.bf16.msra.mxu0 %v466
  %626 = vmatprep.subr.bf16.mxu0 0
  %627 = vmatpush1.bf16.msra.mxu0 %v467
  %628 = vmatprep.subr.bf16.mxu0 0
  %629 = vmatpush1.bf16.msra.mxu0 %v468
  %630 = vmatprep.subr.bf16.mxu0 0
  %631 = vmatpush1.bf16.msra.mxu0 %v469
  %632 = vmatprep.subr.bf16.mxu0 0
  %633 = vmatpush1.bf16.msra.mxu0 %v470
  %634 = vmatprep.subr.bf16.mxu0 0
  %635 = vmatpush1.bf16.msra.mxu0 %v471
  %636 = vmatprep.subr.bf16.mxu0 0
  %637 = vmatpush1.bf16.msra.mxu0 %v472
  %638 = vmatprep.subr.bf16.mxu0 0
  %639 = vmatpush1.bf16.msra.mxu0 %v473
  %640 = vmatprep.subr.bf16.mxu0 0
  %641 = vmatpush1.bf16.msra.mxu0 %v474
  %642 = vmatprep.subr.bf16.mxu0 0
  %643 = vmatpush1.bf16.msra.mxu0 %v475
  %644 = vmatprep.mubr.bf16.mxu0 %v175
  %645 = vmatmul.mubr.bf16.gmra.mrb[0].mxu0 %v174
  %v646 = vpop.f32.mrb[0].mxu0
  %v647 = vadd.f32 %v607, %v646
  %v648 = vpop.f32.mrb[0].mxu0
  %v649 = vpop.f32.mrb[0].mxu0
  %v650 = vpop.f32.mrb[0].mxu0
  %651 = vdwg.mxu0
  %652 = vmatprep.subr.bf16.mxu0 0
  %653 = vmatpush1.bf16.msra.mxu0 %v476
  %654 = vmatprep.subr.bf16.mxu0 0
  %655 = vmatpush1.bf16.msra.mxu0 %v477
  %656 = vmatprep.subr.bf16.mxu0 0
  %657 = vmatpush1.bf16.msra.mxu0 %v478
  %658 = vmatprep.subr.bf16.mxu0 0
  %659 = vmatpush1.bf16.msra.mxu0 %v479
  %660 = vmatprep.subr.bf16.mxu0 0
  %661 = vmatpush1.bf16.msra.mxu0 %v480
  %662 = vmatprep.subr.bf16.mxu0 0
  %663 = vmatpush1.bf16.msra.mxu0 %v481
  %664 = vmatprep.subr.bf16.mxu0 0
  %665 = vmatpush1.bf16.msra.mxu0 %v482
  %666 = vmatprep.subr.bf16.mxu0 0
  %667 = vmatpush1.bf16.msra.mxu0 %v483
  %668 = vmatprep.subr.bf16.mxu0 0
  %669 = vmatpush1.bf16.msra.mxu0 %v484
  %670 = vmatprep.subr.bf16.mxu0 0
  %671 = vmatpush1.bf16.msra.mxu0 %v485
  %672 = vmatprep.subr.bf16.mxu0 0
  %673 = vmatpush1.bf16.msra.mxu0 %v486
  %674 = vmatprep.subr.bf16.mxu0 0
  %675 = vmatpush1.bf16.msra.mxu0 %v487
  %676 = vmatprep.subr.bf16.mxu0 0
  %677 = vmatpush1.bf16.msra.mxu0 %v488
  %678 = vmatprep.subr.bf16.mxu0 0
  %679 = vmatpush1.bf16.msra.mxu0 %v489
  %680 = vmatprep.subr.bf16.mxu0 0
  %681 = vmatpush1.bf16.msra.mxu0 %v490
  %682 = vmatprep.subr.bf16.mxu0 0
  %683 = vmatpush1.bf16.msra.mxu0 %v491
  %684 = vmatprep.mubr.bf16.mxu0 %v177
  %685 = vmatmul.mubr.bf16.gmra.mrb[0].mxu0 %v176
  %v686 = vpop.f32.mrb[0].mxu0
  %v687 = vadd.f32 %v647, %v686
  %v688 = vpop.f32.mrb[0].mxu0
  %v689 = vpop.f32.mrb[0].mxu0
  %v690 = vpop.f32.mrb[0].mxu0
  %691 = vdwg.mxu0
  %692 = vmatprep.subr.bf16.mxu0 0
  %693 = vmatpush1.bf16.msra.mxu0 %v492
  %694 = vmatprep.subr.bf16.mxu0 0
  %695 = vmatpush1.bf16.msra.mxu0 %v493
  %696 = vmatprep.subr.bf16.mxu0 0
  %697 = vmatpush1.bf16.msra.mxu0 %v494
  %698 = vmatprep.subr.bf16.mxu0 0
  %699 = vmatpush1.bf16.msra.mxu0 %v495
  %700 = vmatprep.subr.bf16.mxu0 0
  %701 = vmatpush1.bf16.msra.mxu0 %v496
  %702 = vmatprep.subr.bf16.mxu0 0
  %703 = vmatpush1.bf16.msra.mxu0 %v497
  %704 = vmatprep.subr.bf16.mxu0 0
  %705 = vmatpush1.bf16.msra.mxu0 %v498
  %706 = vmatprep.subr.bf16.mxu0 0
  %707 = vmatpush1.bf16.msra.mxu0 %v499
  %708 = vmatprep.subr.bf16.mxu0 0
  %709 = vmatpush1.bf16.msra.mxu0 %v500
  %710 = vmatprep.subr.bf16.mxu0 0
  %711 = vmatpush1.bf16.msra.mxu0 %v501
  %712 = vmatprep.subr.bf16.mxu0 0
  %713 = vmatpush1.bf16.msra.mxu0 %v502
  %714 = vmatprep.subr.bf16.mxu0 0
  %715 = vmatpush1.bf16.msra.mxu0 %v503
  %716 = vmatprep.subr.bf16.mxu0 0
  %717 = vmatpush1.bf16.msra.mxu0 %v504
  %718 = vmatprep.subr.bf16.mxu0 0
  %719 = vmatpush1.bf16.msra.mxu0 %v505
  %720 = vmatprep.subr.bf16.mxu0 0
  %721 = vmatpush1.bf16.msra.mxu0 %v506
  %722 = vmatprep.subr.bf16.mxu0 0
  %723 = vmatpush1.bf16.msra.mxu0 %v507
  %724 = vmatprep.mubr.bf16.mxu0 %v179
  %725 = vmatmul.mubr.bf16.gmra.mrb[0].mxu0 %v178
  %v726 = vpop.f32.mrb[0].mxu0
  %v727 = vadd.f32 %v687, %v726
  %v728 = vpop.f32.mrb[0].mxu0
  %v729 = vpop.f32.mrb[0].mxu0
  %v730 = vpop.f32.mrb[0].mxu0
  %731 = vdwg.mxu0
  %v732 = vmax.f32 %v727, 0.0
  %v733 = vpack.c.bf16 %v732, %v732
  %v734 = vld [vmem:[%s3] sm:$0xff]
  %v735 = vld [vmem:[%s3 + $0x8] sm:$0xff]
  %v736 = vld [vmem:[%s3 + $0x10] sm:$0xff]
  %v737 = vld [vmem:[%s3 + $0x18] sm:$0xff]
  %v738 = vld [vmem:[%s3 + $0x20] sm:$0xff]
  %v739 = vld [vmem:[%s3 + $0x28] sm:$0xff]
  %v740 = vld [vmem:[%s3 + $0x30] sm:$0xff]
  %v741 = vld [vmem:[%s3 + $0x38] sm:$0xff]
  %v742 = vld [vmem:[%s3 + $0x40] sm:$0xff]
  %v743 = vld [vmem:[%s3 + $0x48] sm:$0xff]
  %v744 = vld [vmem:[%s3 + $0x50] sm:$0xff]
  %v745 = vld [vmem:[%s3 + $0x58] sm:$0xff]
  %v746 = vld [vmem:[%s3 + $0x60] sm:$0xff]
  %v747 = vld [vmem:[%s3 + $0x68] sm:$0xff]
  %v748 = vld [vmem:[%s3 + $0x70] sm:$0xff]
  %v749 = vld [vmem:[%s3 + $0x78] sm:$0xff]
  %v750 = vld [vmem:[%s3 + $0x80] sm:$0xff]
  %v751 = vld [vmem:[%s3 + $0x88] sm:$0xff]
  %v752 = vld [vmem:[%s3 + $0x90] sm:$0xff]
  %v753 = vld [vmem:[%s3 + $0x98] sm:$0xff]
  %v754 = vld [vmem:[%s3 + $0xa0] sm:$0xff]
  %v755 = vld [vmem:[%s3 + $0xa8] sm:$0xff]
  %v756 = vld [vmem:[%s3 + $0xb0] sm:$0xff]
  %v757 = vld [vmem:[%s3 + $0xb8] sm:$0xff]
  %v758 = vld [vmem:[%s3 + $0xc0] sm:$0xff]
  %v759 = vld [vmem:[%s3 + $0xc8] sm:$0xff]
  %v760 = vld [vmem:[%s3 + $0xd0] sm:$0xff]
  %v761 = vld [vmem:[%s3 + $0xd8] sm:$0xff]
  %v762 = vld [vmem:[%s3 + $0xe0] sm:$0xff]
  %v763 = vld [vmem:[%s3 + $0xe8] sm:$0xff]
  %v764 = vld [vmem:[%s3 + $0xf0] sm:$0xff]
  %v765 = vld [vmem:[%s3 + $0xf8] sm:$0xff]
  %v766 = vld [vmem:[%s3 + $0x100] sm:$0xff]
  %v767 = vld [vmem:[%s3 + $0x108] sm:$0xff]
  %v768 = vld [vmem:[%s3 + $0x110] sm:$0xff]
  %v769 = vld [vmem:[%s3 + $0x118] sm:$0xff]
  %v770 = vld [vmem:[%s3 + $0x120] sm:$0xff]
  %v771 = vld [vmem:[%s3 + $0x128] sm:$0xff]
  %v772 = vld [vmem:[%s3 + $0x130] sm:$0xff]
  %v773 = vld [vmem:[%s3 + $0x138] sm:$0xff]
  %v774 = vld [vmem:[%s3 + $0x140] sm:$0xff]
  %v775 = vld [vmem:[%s3 + $0x148] sm:$0xff]
  %v776 = vld [vmem:[%s3 + $0x150] sm:$0xff]
  %v777 = vld [vmem:[%s3 + $0x158] sm:$0xff]
  %v778 = vld [vmem:[%s3 + $0x160] sm:$0xff]
  %v779 = vld [vmem:[%s3 + $0x168] sm:$0xff]
  %v780 = vld [vmem:[%s3 + $0x170] sm:$0xff]
  %v781 = vld [vmem:[%s3 + $0x178] sm:$0xff]
  %v782 = vld [vmem:[%s3 + $0x180] sm:$0xff]
  %v783 = vld [vmem:[%s3 + $0x188] sm:$0xff]
  %v784 = vld [vmem:[%s3 + $0x190] sm:$0xff]
  %v785 = vld [vmem:[%s3 + $0x198] sm:$0xff]
  %v786 = vld [vmem:[%s3 + $0x1a0] sm:$0xff]
  %v787 = vld [vmem:[%s3 + $0x1a8] sm:$0xff]
  %v788 = vld [vmem:[%s3 + $0x1b0] sm:$0xff]
  %v789 = vld [vmem:[%s3 + $0x1b8] sm:$0xff]
  %v790 = vld [vmem:[%s3 + $0x1c0] sm:$0xff]
  %v791 = vld [vmem:[%s3 + $0x1c8] sm:$0xff]
  %v792 = vld [vmem:[%s3 + $0x1d0] sm:$0xff]
  %v793 = vld [vmem:[%s3 + $0x1d8] sm:$0xff]
  %v794 = vld [vmem:[%s3 + $0x1e0] sm:$0xff]
  %v795 = vld [vmem:[%s3 + $0x1e8] sm:$0xff]
  %v796 = vld [vmem:[%s3 + $0x1f0] sm:$0xff]
  %v797 = vld [vmem:[%s3 + $0x1f8] sm:$0xff]
  %v798 = vld [vmem:[%s4] sm:$0xff]
  %v800 = vlaneseq
  %v801 = vshrl.u32 %v800, 7
  %v802 = vsub.s32 0, %v801
  %v803 = vrot.slane %v798, %v802
  %v804 = vlaneseq
  %v805 = vshrl.u32 %v804, 7
  %v806 = vsub.s32 1, %v805
  %v807 = vrot.slane %v798, %v806
  %v808 = vlaneseq
  %v809 = vshrl.u32 %v808, 7
  %v810 = vsub.s32 2, %v809
  %v811 = vrot.slane %v798, %v810
  %v812 = vlaneseq
  %v813 = vshrl.u32 %v812, 7
  %v814 = vsub.s32 3, %v813
  %v815 = vrot.slane %v798, %v814
  %v816 = vlaneseq
  %v817 = vshrl.u32 %v816, 7
  %v818 = vsub.s32 4, %v817
  %v819 = vrot.slane %v798, %v818
  %v820 = vlaneseq
  %v821 = vshrl.u32 %v820, 7
  %v822 = vsub.s32 5, %v821
  %v823 = vrot.slane %v798, %v822
  %v824 = vlaneseq
  %v825 = vshrl.u32 %v824, 7
  %v826 = vsub.s32 6, %v825
  %v827 = vrot.slane %v798, %v826
  %v828 = vlaneseq
  %v829 = vshrl.u32 %v828, 7
  %v830 = vsub.s32 7, %v829
  %v831 = vrot.slane %v798, %v830
  %v904 = vunpack.c.l.b16 %v734
  %v905 = vunpack.c.h.b16 %v734
  %v906 = vunpack.c.l.b16 %v735
  %v907 = vunpack.c.h.b16 %v735
  %v908 = vunpack.c.l.b16 %v736
  %v909 = vunpack.c.h.b16 %v736
  %v910 = vunpack.c.l.b16 %v737
  %v911 = vunpack.c.h.b16 %v737
  %v912 = vunpack.c.l.b16 %v738
  %v913 = vunpack.c.h.b16 %v738
  %v914 = vunpack.c.l.b16 %v739
  %v915 = vunpack.c.h.b16 %v739
  %v916 = vunpack.c.l.b16 %v740
  %v917 = vunpack.c.h.b16 %v740
  %v918 = vunpack.c.l.b16 %v741
  %v919 = vunpack.c.h.b16 %v741
  %v920 = vunpack.c.l.b16 %v742
  %v921 = vunpack.c.h.b16 %v742
  %v922 = vunpack.c.l.b16 %v743
  %v923 = vunpack.c.h.b16 %v743
  %v924 = vunpack.c.l.b16 %v744
  %v925 = vunpack.c.h.b16 %v744
  %v926 = vunpack.c.l.b16 %v745
  %v927 = vunpack.c.h.b16 %v745
  %v928 = vunpack.c.l.b16 %v746
  %v929 = vunpack.c.h.b16 %v746
  %v930 = vunpack.c.l.b16 %v747
  %v931 = vunpack.c.h.b16 %v747
  %v932 = vunpack.c.l.b16 %v748
  %v933 = vunpack.c.h.b16 %v748
  %v934 = vunpack.c.l.b16 %v749
  %v935 = vunpack.c.h.b16 %v749
  %v936 = vunpack.c.l.b16 %v750
  %v937 = vunpack.c.h.b16 %v750
  %v938 = vunpack.c.l.b16 %v751
  %v939 = vunpack.c.h.b16 %v751
  %v940 = vunpack.c.l.b16 %v752
  %v941 = vunpack.c.h.b16 %v752
  %v942 = vunpack.c.l.b16 %v753
  %v943 = vunpack.c.h.b16 %v753
  %v944 = vunpack.c.l.b16 %v754
  %v945 = vunpack.c.h.b16 %v754
  %v946 = vunpack.c.l.b16 %v755
  %v947 = vunpack.c.h.b16 %v755
  %v948 = vunpack.c.l.b16 %v756
  %v949 = vunpack.c.h.b16 %v756
  %v950 = vunpack.c.l.b16 %v757
  %v951 = vunpack.c.h.b16 %v757
  %v952 = vunpack.c.l.b16 %v758
  %v953 = vunpack.c.h.b16 %v758
  %v954 = vunpack.c.l.b16 %v759
  %v955 = vunpack.c.h.b16 %v759
  %v956 = vunpack.c.l.b16 %v760
  %v957 = vunpack.c.h.b16 %v760
  %v958 = vunpack.c.l.b16 %v761
  %v959 = vunpack.c.h.b16 %v761
  %v960 = vunpack.c.l.b16 %v762
  %v961 = vunpack.c.h.b16 %v762
  %v962 = vunpack.c.l.b16 %v763
  %v963 = vunpack.c.h.b16 %v763
  %v964 = vunpack.c.l.b16 %v764
  %v965 = vunpack.c.h.b16 %v764
  %v966 = vunpack.c.l.b16 %v765
  %v967 = vunpack.c.h.b16 %v765
  %v968 = vunpack.c.l.b16 %v766
  %v969 = vunpack.c.h.b16 %v766
  %v970 = vunpack.c.l.b16 %v767
  %v971 = vunpack.c.h.b16 %v767
  %v972 = vunpack.c.l.b16 %v768
  %v973 = vunpack.c.h.b16 %v768
  %v974 = vunpack.c.l.b16 %v769
  %v975 = vunpack.c.h.b16 %v769
  %v976 = vunpack.c.l.b16 %v770
  %v977 = vunpack.c.h.b16 %v770
  %v978 = vunpack.c.l.b16 %v771
  %v979 = vunpack.c.h.b16 %v771
  %v980 = vunpack.c.l.b16 %v772
  %v981 = vunpack.c.h.b16 %v772
  %v982 = vunpack.c.l.b16 %v773
  %v983 = vunpack.c.h.b16 %v773
  %v984 = vunpack.c.l.b16 %v774
  %v985 = vunpack.c.h.b16 %v774
  %v986 = vunpack.c.l.b16 %v775
  %v987 = vunpack.c.h.b16 %v775
  %v988 = vunpack.c.l.b16 %v776
  %v989 = vunpack.c.h.b16 %v776
  %v990 = vunpack.c.l.b16 %v777
  %v991 = vunpack.c.h.b16 %v777
  %v992 = vunpack.c.l.b16 %v778
  %v993 = vunpack.c.h.b16 %v778
  %v994 = vunpack.c.l.b16 %v779
  %v995 = vunpack.c.h.b16 %v779
  %v996 = vunpack.c.l.b16 %v780
  %v997 = vunpack.c.h.b16 %v780
  %v998 = vunpack.c.l.b16 %v781
  %v999 = vunpack.c.h.b16 %v781
  %v1000 = vunpack.c.l.b16 %v782
  %v1001 = vunpack.c.h.b16 %v782
  %v1002 = vunpack.c.l.b16 %v783
  %v1003 = vunpack.c.h.b16 %v783
  %v1004 = vunpack.c.l.b16 %v784
  %v1005 = vunpack.c.h.b16 %v784
  %v1006 = vunpack.c.l.b16 %v785
  %v1007 = vunpack.c.h.b16 %v785
  %v1008 = vunpack.c.l.b16 %v786
  %v1009 = vunpack.c.h.b16 %v786
  %v1010 = vunpack.c.l.b16 %v787
  %v1011 = vunpack.c.h.b16 %v787
  %v1012 = vunpack.c.l.b16 %v788
  %v1013 = vunpack.c.h.b16 %v788
  %v1014 = vunpack.c.l.b16 %v789
  %v1015 = vunpack.c.h.b16 %v789
  %v1016 = vunpack.c.l.b16 %v790
  %v1017 = vunpack.c.h.b16 %v790
  %v1018 = vunpack.c.l.b16 %v791
  %v1019 = vunpack.c.h.b16 %v791
  %v1020 = vunpack.c.l.b16 %v792
  %v1021 = vunpack.c.h.b16 %v792
  %v1022 = vunpack.c.l.b16 %v793
  %v1023 = vunpack.c.h.b16 %v793
  %v1024 = vunpack.c.l.b16 %v794
  %v1025 = vunpack.c.h.b16 %v794
  %v1026 = vunpack.c.l.b16 %v795
  %v1027 = vunpack.c.h.b16 %v795
  %v1028 = vunpack.c.l.b16 %v796
  %v1029 = vunpack.c.h.b16 %v796
  %v1030 = vunpack.c.l.b16 %v797
  %v1031 = vunpack.c.h.b16 %v797
  %v1032 = vpack.c.b16 %v912, %v904
  %v1033 = vpack.c.b16 %v913, %v905
  %v1034 = vpack.c.b16 %v914, %v906
  %v1035 = vpack.c.b16 %v915, %v907
  %v1036 = vpack.c.b16 %v916, %v908
  %v1037 = vpack.c.b16 %v917, %v909
  %v1038 = vpack.c.b16 %v918, %v910
  %v1039 = vpack.c.b16 %v919, %v911
  %v1040 = vpack.c.b16 %v928, %v920
  %v1041 = vpack.c.b16 %v929, %v921
  %v1042 = vpack.c.b16 %v930, %v922
  %v1043 = vpack.c.b16 %v931, %v923
  %v1044 = vpack.c.b16 %v932, %v924
  %v1045 = vpack.c.b16 %v933, %v925
  %v1046 = vpack.c.b16 %v934, %v926
  %v1047 = vpack.c.b16 %v935, %v927
  %v1048 = vpack.c.b16 %v944, %v936
  %v1049 = vpack.c.b16 %v945, %v937
  %v1050 = vpack.c.b16 %v946, %v938
  %v1051 = vpack.c.b16 %v947, %v939
  %v1052 = vpack.c.b16 %v948, %v940
  %v1053 = vpack.c.b16 %v949, %v941
  %v1054 = vpack.c.b16 %v950, %v942
  %v1055 = vpack.c.b16 %v951, %v943
  %v1056 = vpack.c.b16 %v960, %v952
  %v1057 = vpack.c.b16 %v961, %v953
  %v1058 = vpack.c.b16 %v962, %v954
  %v1059 = vpack.c.b16 %v963, %v955
  %v1060 = vpack.c.b16 %v964, %v956
  %v1061 = vpack.c.b16 %v965, %v957
  %v1062 = vpack.c.b16 %v966, %v958
  %v1063 = vpack.c.b16 %v967, %v959
  %v1064 = vpack.c.b16 %v976, %v968
  %v1065 = vpack.c.b16 %v977, %v969
  %v1066 = vpack.c.b16 %v978, %v970
  %v1067 = vpack.c.b16 %v979, %v971
  %v1068 = vpack.c.b16 %v980, %v972
  %v1069 = vpack.c.b16 %v981, %v973
  %v1070 = vpack.c.b16 %v982, %v974
  %v1071 = vpack.c.b16 %v983, %v975
  %v1072 = vpack.c.b16 %v992, %v984
  %v1073 = vpack.c.b16 %v993, %v985
  %v1074 = vpack.c.b16 %v994, %v986
  %v1075 = vpack.c.b16 %v995, %v987
  %v1076 = vpack.c.b16 %v996, %v988
  %v1077 = vpack.c.b16 %v997, %v989
  %v1078 = vpack.c.b16 %v998, %v990
  %v1079 = vpack.c.b16 %v999, %v991
  %v1080 = vpack.c.b16 %v1008, %v1000
  %v1081 = vpack.c.b16 %v1009, %v1001
  %v1082 = vpack.c.b16 %v1010, %v1002
  %v1083 = vpack.c.b16 %v1011, %v1003
  %v1084 = vpack.c.b16 %v1012, %v1004
  %v1085 = vpack.c.b16 %v1013, %v1005
  %v1086 = vpack.c.b16 %v1014, %v1006
  %v1087 = vpack.c.b16 %v1015, %v1007
  %v1088 = vpack.c.b16 %v1024, %v1016
  %v1089 = vpack.c.b16 %v1025, %v1017
  %v1090 = vpack.c.b16 %v1026, %v1018
  %v1091 = vpack.c.b16 %v1027, %v1019
  %v1092 = vpack.c.b16 %v1028, %v1020
  %v1093 = vpack.c.b16 %v1029, %v1021
  %v1094 = vpack.c.b16 %v1030, %v1022
  %v1095 = vpack.c.b16 %v1031, %v1023
  %1160 = vmatprep.subr.bf16.mxu0 %v1033
  %1161 = vmatpush1.bf16.msra.mxu0 %v1032
  %1162 = vmatprep.subr.bf16.mxu0 %v1041
  %1163 = vmatpush1.bf16.msra.mxu0 %v1040
  %1164 = vmatprep.subr.bf16.mxu0 %v1049
  %1165 = vmatpush1.bf16.msra.mxu0 %v1048
  %1166 = vmatprep.subr.bf16.mxu0 %v1057
  %1167 = vmatpush1.bf16.msra.mxu0 %v1056
  %1168 = vmatprep.subr.bf16.mxu0 %v1065
  %1169 = vmatpush1.bf16.msra.mxu0 %v1064
  %1170 = vmatprep.subr.bf16.mxu0 %v1073
  %1171 = vmatpush1.bf16.msra.mxu0 %v1072
  %1172 = vmatprep.subr.bf16.mxu0 %v1081
  %1173 = vmatpush1.bf16.msra.mxu0 %v1080
  %1174 = vmatprep.subr.bf16.mxu0 %v1089
  %1175 = vmatpush1.bf16.msra.mxu0 %v1088
  %1176 = vmatprep.subr.bf16.mxu0 0
  %1177 = vmatpush1.bf16.msra.mxu0 0
  %1178 = vmatprep.subr.bf16.mxu0 0
  %1179 = vmatpush1.bf16.msra.mxu0 0
  %1180 = vmatprep.subr.bf16.mxu0 0
  %1181 = vmatpush1.bf16.msra.mxu0 0
  %1182 = vmatprep.subr.bf16.mxu0 0
  %1183 = vmatpush1.bf16.msra.mxu0 0
  %1184 = vmatprep.subr.bf16.mxu0 0
  %1185 = vmatpush1.bf16.msra.mxu0 0
  %1186 = vmatprep.subr.bf16.mxu0 0
  %1187 = vmatpush1.bf16.msra.mxu0 0
  %1188 = vmatprep.subr.bf16.mxu0 0
  %1189 = vmatpush1.bf16.msra.mxu0 0
  %1190 = vmatprep.subr.bf16.mxu0 0
  %1191 = vmatpush1.bf16.msra.mxu0 0
  %1192 = vmatprep.mubr.bf16.mxu0 0
  %1193 = vmatmul.mubr.bf16.gmra.mrb[0].mxu0 %v733
  %v1194 = vpop.f32.mrb[0].mxu0
  %v1195 = vadd.f32 %v803, %v1194
  %v1196 = vpop.f32.mrb[0].mxu0
  %v1197 = vadd.f32 %v807, %v1196
  %v1198 = vpop.f32.mrb[0].mxu0
  %v1199 = vpop.f32.mrb[0].mxu0
  %1200 = vdwg.mxu0
  %1201 = vmatprep.subr.bf16.mxu0 %v1035
  %1202 = vmatpush1.bf16.msra.mxu0 %v1034
  %1203 = vmatprep.subr.bf16.mxu0 %v1043
  %1204 = vmatpush1.bf16.msra.mxu0 %v1042
  %1205 = vmatprep.subr.bf16.mxu0 %v1051
  %1206 = vmatpush1.bf16.msra.mxu0 %v1050
  %1207 = vmatprep.subr.bf16.mxu0 %v1059
  %1208 = vmatpush1.bf16.msra.mxu0 %v1058
  %1209 = vmatprep.subr.bf16.mxu0 %v1067
  %1210 = vmatpush1.bf16.msra.mxu0 %v1066
  %1211 = vmatprep.subr.bf16.mxu0 %v1075
  %1212 = vmatpush1.bf16.msra.mxu0 %v1074
  %1213 = vmatprep.subr.bf16.mxu0 %v1083
  %1214 = vmatpush1.bf16.msra.mxu0 %v1082
  %1215 = vmatprep.subr.bf16.mxu0 %v1091
  %1216 = vmatpush1.bf16.msra.mxu0 %v1090
  %1217 = vmatprep.subr.bf16.mxu0 0
  %1218 = vmatpush1.bf16.msra.mxu0 0
  %1219 = vmatprep.subr.bf16.mxu0 0
  %1220 = vmatpush1.bf16.msra.mxu0 0
  %1221 = vmatprep.subr.bf16.mxu0 0
  %1222 = vmatpush1.bf16.msra.mxu0 0
  %1223 = vmatprep.subr.bf16.mxu0 0
  %1224 = vmatpush1.bf16.msra.mxu0 0
  %1225 = vmatprep.subr.bf16.mxu0 0
  %1226 = vmatpush1.bf16.msra.mxu0 0
  %1227 = vmatprep.subr.bf16.mxu0 0
  %1228 = vmatpush1.bf16.msra.mxu0 0
  %1229 = vmatprep.subr.bf16.mxu0 0
  %1230 = vmatpush1.bf16.msra.mxu0 0
  %1231 = vmatprep.subr.bf16.mxu0 0
  %1232 = vmatpush1.bf16.msra.mxu0 0
  %1233 = vmatprep.mubr.bf16.mxu0 0
  %1234 = vmatmul.mubr.bf16.gmra.mrb[0].mxu0 %v733
  %v1235 = vpop.f32.mrb[0].mxu0
  %v1236 = vadd.f32 %v811, %v1235
  %v1237 = vpop.f32.mrb[0].mxu0
  %v1238 = vadd.f32 %v815, %v1237
  %v1239 = vpop.f32.mrb[0].mxu0
  %v1240 = vpop.f32.mrb[0].mxu0
  %1241 = vdwg.mxu0
  %1242 = vmatprep.subr.bf16.mxu0 %v1037
  %1243 = vmatpush1.bf16.msra.mxu0 %v1036
  %1244 = vmatprep.subr.bf16.mxu0 %v1045
  %1245 = vmatpush1.bf16.msra.mxu0 %v1044
  %1246 = vmatprep.subr.bf16.mxu0 %v1053
  %1247 = vmatpush1.bf16.msra.mxu0 %v1052
  %1248 = vmatprep.subr.bf16.mxu0 %v1061
  %1249 = vmatpush1.bf16.msra.mxu0 %v1060
  %1250 = vmatprep.subr.bf16.mxu0 %v1069
  %1251 = vmatpush1.bf16.msra.mxu0 %v1068
  %1252 = vmatprep.subr.bf16.mxu0 %v1077
  %1253 = vmatpush1.bf16.msra.mxu0 %v1076
  %1254 = vmatprep.subr.bf16.mxu0 %v1085
  %1255 = vmatpush1.bf16.msra.mxu0 %v1084
  %1256 = vmatprep.subr.bf16.mxu0 %v1093
  %1257 = vmatpush1.bf16.msra.mxu0 %v1092
  %1258 = vmatprep.subr.bf16.mxu0 0
  %1259 = vmatpush1.bf16.msra.mxu0 0
  %1260 = vmatprep.subr.bf16.mxu0 0
  %1261 = vmatpush1.bf16.msra.mxu0 0
  %1262 = vmatprep.subr.bf16.mxu0 0
  %1263 = vmatpush1.bf16.msra.mxu0 0
  %1264 = vmatprep.subr.bf16.mxu0 0
  %1265 = vmatpush1.bf16.msra.mxu0 0
  %1266 = vmatprep.subr.bf16.mxu0 0
  %1267 = vmatpush1.bf16.msra.mxu0 0
  %1268 = vmatprep.subr.bf16.mxu0 0
  %1269 = vmatpush1.bf16.msra.mxu0 0
  %1270 = vmatprep.subr.bf16.mxu0 0
  %1271 = vmatpush1.bf16.msra.mxu0 0
  %1272 = vmatprep.subr.bf16.mxu0 0
  %1273 = vmatpush1.bf16.msra.mxu0 0
  %1274 = vmatprep.mubr.bf16.mxu0 0
  %1275 = vmatmul.mubr.bf16.gmra.mrb[0].mxu0 %v733
  %v1276 = vpop.f32.mrb[0].mxu0
  %v1277 = vadd.f32 %v819, %v1276
  %v1278 = vpop.f32.mrb[0].mxu0
  %v1279 = vadd.f32 %v823, %v1278
  %v1280 = vpop.f32.mrb[0].mxu0
  %v1281 = vpop.f32.mrb[0].mxu0
  %1282 = vdwg.mxu0
  %1283 = vmatprep.subr.bf16.mxu0 %v1039
  %1284 = vmatpush1.bf16.msra.mxu0 %v1038
  %1285 = vmatprep.subr.bf16.mxu0 %v1047
  %1286 = vmatpush1.bf16.msra.mxu0 %v1046
  %1287 = vmatprep.subr.bf16.mxu0 %v1055
  %1288 = vmatpush1.bf16.msra.mxu0 %v1054
  %1289 = vmatprep.subr.bf16.mxu0 %v1063
  %1290 = vmatpush1.bf16.msra.mxu0 %v1062
  %1291 = vmatprep.subr.bf16.mxu0 %v1071
  %1292 = vmatpush1.bf16.msra.mxu0 %v1070
  %1293 = vmatprep.subr.bf16.mxu0 %v1079
  %1294 = vmatpush1.bf16.msra.mxu0 %v1078
  %1295 = vmatprep.subr.bf16.mxu0 %v1087
  %1296 = vmatpush1.bf16.msra.mxu0 %v1086
  %1297 = vmatprep.subr.bf16.mxu0 %v1095
  %1298 = vmatpush1.bf16.msra.mxu0 %v1094
  %1299 = vmatprep.subr.bf16.mxu0 0
  %1300 = vmatpush1.bf16.msra.mxu0 0
  %1301 = vmatprep.subr.bf16.mxu0 0
  %1302 = vmatpush1.bf16.msra.mxu0 0
  %1303 = vmatprep.subr.bf16.mxu0 0
  %1304 = vmatpush1.bf16.msra.mxu0 0
  %1305 = vmatprep.subr.bf16.mxu0 0
  %1306 = vmatpush1.bf16.msra.mxu0 0
  %1307 = vmatprep.subr.bf16.mxu0 0
  %1308 = vmatpush1.bf16.msra.mxu0 0
  %1309 = vmatprep.subr.bf16.mxu0 0
  %1310 = vmatpush1.bf16.msra.mxu0 0
  %1311 = vmatprep.subr.bf16.mxu0 0
  %1312 = vmatpush1.bf16.msra.mxu0 0
  %1313 = vmatprep.subr.bf16.mxu0 0
  %1314 = vmatpush1.bf16.msra.mxu0 0
  %1315 = vmatprep.mubr.bf16.mxu0 0
  %1316 = vmatmul.mubr.bf16.gmra.mrb[0].mxu0 %v733
  %v1317 = vpop.f32.mrb[0].mxu0
  %v1318 = vadd.f32 %v827, %v1317
  %v1319 = vpop.f32.mrb[0].mxu0
  %v1320 = vadd.f32 %v831, %v1319
  %v1321 = vpop.f32.mrb[0].mxu0
  %v1322 = vpop.f32.mrb[0].mxu0
  %1323 = vdwg.mxu0
  %v1324 = vxor.u32 %v1195, 2147483648
  %v1325 = vxor.u32 %v1197, 2147483648
  %v1326 = vxor.u32 %v1236, 2147483648
  %v1327 = vxor.u32 %v1238, 2147483648
  %v1328 = vxor.u32 %v1277, 2147483648
  %v1329 = vxor.u32 %v1279, 2147483648
  %v1330 = vxor.u32 %v1318, 2147483648
  %v1331 = vxor.u32 %v1320, 2147483648
  %v1332 = vmul.f32 %v1324, 1.442695
  %v1333 = vpow.pop %v1332
  %v1334 = vmul.f32 %v1325, 1.442695
  %v1335 = vpow.pop %v1334
  %v1336 = vmul.f32 %v1326, 1.442695
  %v1337 = vpow.pop %v1336
  %v1338 = vmul.f32 %v1327, 1.442695
  %v1339 = vpow.pop %v1338
  %v1340 = vmul.f32 %v1328, 1.442695
  %v1341 = vpow.pop %v1340
  %v1342 = vmul.f32 %v1329, 1.442695
  %v1343 = vpow.pop %v1342
  %v1344 = vmul.f32 %v1330, 1.442695
  %v1345 = vpow.pop %v1344
  %v1346 = vmul.f32 %v1331, 1.442695
  %v1347 = vpow.pop %v1346
  %v1348 = vadd.f32 %v1333, 1.0
  %v1349 = vadd.f32 %v1335, 1.0
  %v1350 = vadd.f32 %v1337, 1.0
  %v1351 = vadd.f32 %v1339, 1.0
  %v1352 = vadd.f32 %v1341, 1.0
  %v1353 = vadd.f32 %v1343, 1.0
  %v1354 = vadd.f32 %v1345, 1.0
  %v1355 = vadd.f32 %v1347, 1.0
  %v1356 = vrcp.pop %v1348
  %v1357 = vmul.f32 1.0, %v1356
  %v1358 = vrcp.pop %v1349
  %v1359 = vmul.f32 1.0, %v1358
  %v1360 = vrcp.pop %v1350
  %v1361 = vmul.f32 1.0, %v1360
  %v1362 = vrcp.pop %v1351
  %v1363 = vmul.f32 1.0, %v1362
  %v1364 = vrcp.pop %v1352
  %v1365 = vmul.f32 1.0, %v1364
  %v1366 = vrcp.pop %v1353
  %v1367 = vmul.f32 1.0, %v1366
  %v1368 = vrcp.pop %v1354
  %v1369 = vmul.f32 1.0, %v1368
  %v1370 = vrcp.pop %v1355
  %v1371 = vmul.f32 1.0, %v1370
  %1372 = vst [vmem:[%s5] sm:$0xff] %v1357
  %1373 = vst [vmem:[%s5 + $0x8] sm:$0xff] %v1359
  %1374 = vst [vmem:[%s5 + $0x10] sm:$0xff] %v1361
  %1375 = vst [vmem:[%s5 + $0x18] sm:$0xff] %v1363
  %1376 = vst [vmem:[%s5 + $0x20] sm:$0xff] %v1365
  %1377 = vst [vmem:[%s5 + $0x28] sm:$0xff] %v1367
  %1378 = vst [vmem:[%s5 + $0x30] sm:$0xff] %v1369
  %1379 = vst [vmem:[%s5 + $0x38] sm:$0xff] %v1371
  // Predicated region
  $region22: #{fast_autoencoder.1} parent=0 // pred_check
    _
  $region23: #{fast_autoencoder.1} parent=0 // pred_check_branch
    %1381 = sbr.rel (0) target = $region25
  $region24: #{fast_autoencoder.1} parent=0 // pred_region
    _
  $region25: #{fast_autoencoder.1} parent=0 // pred_fallthru
    _
  // Predicated region
  $region26: #{fast_autoencoder.1} parent=0 // pred_check
    _
  $region27: #{fast_autoencoder.1} parent=0 // pred_check_branch
    %1383 = sbr.rel (0) target = $region29
  $region28: #{fast_autoencoder.1} parent=0 // pred_region
    _
  $region29: #{fast_autoencoder.1} parent=0 // pred_fallthru
    _

</llo_original>
